<compile_context>
chip_gen: v7x
topology: tpu7x:2x2x1
jax: 0.10.0
libtpu: 0.0.40
codegen_flags: <defaults>
</compile_context>

<pallas_src>
import jax
import jax.numpy as jnp
from jax.experimental import pallas as pl
from jax.experimental.pallas import tpu as pltpu

LANE = 128


def binary_classifier_kernel(
    x_ref,             # (TB, TS, Din)  raw input tile (stored dtype)
    w01_ref, b01_ref,  # fused encoder+layer1: (Din, E1p), (1, E1p)
    w2_ref, b2_ref,    # layer2:               (E1p, E2p), (1, E2p)
    w3_ref, b3_ref,    # head (row):           (1, E2p),  (1, 1)
    o_ref,             # (1, TB) lane-dense logits
    acc_ref,           # scratch: (TB, Din) f32 pooled-sum accumulator
):
    s = pl.program_id(1)

    @pl.when(s == 0)
    def _():
        acc_ref[...] = jnp.zeros_like(acc_ref)

    # Sum-pool this sequence tile in f32 (the 1/S mean scale is folded into w01).
    acc_ref[...] += jnp.sum(x_ref[...].astype(jnp.float32), axis=1)

    @pl.when(s == pl.num_programs(1) - 1)
    def _():
        pooled = acc_ref[...]                                            # (TB, Din)

        # Fused encoder + classifier layer 1, then ReLU.
        h = jnp.dot(pooled.astype(w01_ref.dtype), w01_ref[...],
                    preferred_element_type=jnp.float32) + b01_ref[...]
        h = jnp.maximum(h, 0.0)                                          # (TB, E1p)

        # Classifier layer 2, ReLU.
        h = jnp.dot(h.astype(w2_ref.dtype), w2_ref[...],
                    preferred_element_type=jnp.float32) + b2_ref[...]
        h = jnp.maximum(h, 0.0)                                          # (TB, E2p)

        # Width-1 head: VPU multiply + lane reduce (padded tail is zero).
        col = jnp.sum(h * w3_ref[...].astype(jnp.float32), axis=-1,
                      keepdims=True)                                     # (TB, 1)
        row = jnp.transpose(col) + b3_ref[...]                           # (1, TB)
        o_ref[...] = row.astype(o_ref.dtype)


def _round_up(n, m):
    return ((n + m - 1) // m) * m


def _pad_axis(a, axis, multiple):
    size = a.shape[axis]
    pad = (-size) % multiple
    if pad == 0:
        return a
    widths = [(0, 0)] * a.ndim
    widths[axis] = (0, pad)
    return jnp.pad(a, widths)


def _choose_ts(S, max_rows):
    """Largest sequence tile that divides S, is a multiple of 8 (or equals S), and has
    at most max_rows rows; falls back to the smallest legal divisor, then S."""
    if S <= max_rows:
        return S
    best = 0
    for d in range(8, S, 8):
        if S % d == 0 and d <= max_rows:
            best = d
    if best:
        return best
    for d in range(8, S, 8):
        if S % d == 0:
            return d
    return S


def binary_classifier(x, params, *, compute_dtype=jnp.float32,
                      x_vmem_budget_bytes=16 << 20):
    """x: (B, S, Din). Returns (B,) logits, matching `classifier(pooled).squeeze(1)`.

    compute_dtype: dtype fed to the MXU weights (bf16 recommended on v6e/v7x;
    accumulation, biases, pooling, ReLU and the head stay f32).  x is never cast or
    padded in the wrapper on the main path -- it streams in its stored dtype.
    """
    B, S, Din = x.shape
    we, be, w1, b1, w2, b2, w3, b3 = params

    # --- Fuse the (linear, frozen) encoder into classifier layer 1 and fold in 1/S:
    #     mean(x @ We + be, 1) @ W1 + b1 == sum(x, 1) @ (We @ W1 / S) + (be @ W1 + b1)
    # Exact in real arithmetic (matmul associativity; ReLU only applies after layer 1).
    w01 = (we @ w1) / S                                   # (Din, E1)
    b01 = be @ w1 + b1                                    # (1, E1)

    # --- Zero-pad hidden dims to multiples of 128 (exact: zero rows/cols/bias
    # propagate zeros through ReLU and contribute 0 to every contraction).
    w01_p = _pad_axis(w01, 1, LANE).astype(compute_dtype)
    b01_p = _pad_axis(b01, 1, LANE).astype(jnp.float32)
    w2_p = _pad_axis(_pad_axis(w2, 0, LANE), 1, LANE).astype(compute_dtype)
    b2_p = _pad_axis(b2, 1, LANE).astype(jnp.float32)
    w3_row = _pad_axis(w3.reshape(1, -1), 1, LANE).astype(jnp.float32)
    b3_p = b3.reshape(1, 1).astype(jnp.float32)
    weights = (w01_p, b01_p, w2_p, b2_p, w3_row, b3_p)

    # --- Batch tile: avoid any HBM copy of x.  Small B -> single full-extent tile;
    # large B -> largest 128-multiple that divides B (keeps the (1, tb) output block
    # legal and gives >=2 parallel grid steps for v7x's two TensorCores).
    if B <= 512:
        tb, bp = B, B
    else:
        tb = next((c for c in (512, 384, 256, 128) if B % c == 0), 0)
        if tb:
            bp = B
        else:
            # TODO(synk): masked last tile (clamped index_map + guarded store) instead
            # of this HBM pad copy when B has no 128-multiple divisor.
            tb = 128
            bp = _round_up(B, tb)
    if bp != B:
        x = jnp.pad(x, ((0, bp - B), (0, 0), (0, 0)))

    # --- Sequence tile: bound the per-step x block by the VMEM budget, counting the
    # 128-lane padding of the last axis (Din < 128 still occupies 128 lanes in VMEM).
    x_bytes = jnp.dtype(x.dtype).itemsize
    din_lane = _round_up(Din, LANE)
    max_rows = max(1, x_vmem_budget_bytes // (2 * tb * din_lane * x_bytes))
    ts = _choose_ts(S, max_rows)

    # --- Explicit VMEM limit sized from actual need (double-buffered x + weights +
    # accumulator + output), with headroom, well under v7x's 64 MiB physical VMEM.
    def padded_bytes_2d(a):
        r, c = a.shape
        return _round_up(r, 8) * _round_up(c, LANE) * jnp.dtype(a.dtype).itemsize

    x_tile_bytes = tb * _round_up(ts, 8) * din_lane * x_bytes
    w_bytes = sum(padded_bytes_2d(a) for a in weights)
    acc_bytes = _round_up(tb, 8) * din_lane * 4
    out_bytes = 8 * _round_up(tb, LANE) * 4
    need = 2 * x_tile_bytes + 2 * w_bytes + acc_bytes + 2 * out_bytes
    vmem_limit = int(min(max(need + (4 << 20), 16 << 20), 48 << 20))

    out = pl.pallas_call(
        binary_classifier_kernel,
        out_shape=jax.ShapeDtypeStruct((1, bp), jnp.float32),
        grid=(bp // tb, S // ts),
        in_specs=[pl.BlockSpec((tb, ts, Din), lambda i, s: (i, s, 0))]
        # Constant block index -> weights stay resident in VMEM across grid steps.
        + [pl.BlockSpec(a.shape, lambda i, s: (0, 0)) for a in weights],
        out_specs=pl.BlockSpec((1, tb), lambda i, s: (0, i)),
        scratch_shapes=[pltpu.VMEM((tb, Din), jnp.float32)],
        compiler_params=pltpu.CompilerParams(
            # Batch axis parallel (shardable across v7x's 2 TCs); sequence-reduction
            # axis last and "arbitrary" (output block revisited across it).
            dimension_semantics=("parallel", "arbitrary"),
            vmem_limit_bytes=vmem_limit,
        ),
    )(x, *weights)
    return out[0, :B]  # squeeze(1) equivalent


def make_params(key, din, enc_h, embeddings):
    """Deterministic synthetic weights (module __init__ only gives shapes)."""
    keys = jax.random.split(key, 8)
    dims = [enc_h] + list(embeddings)
    we = jax.random.normal(keys[0], (din, enc_h), jnp.float32) * 0.05
    be = jax.random.normal(keys[1], (1, enc_h), jnp.float32) * 0.05
    w1 = jax.random.normal(keys[2], (dims[0], dims[1]), jnp.float32) * 0.05
    b1 = jax.random.normal(keys[3], (1, dims[1]), jnp.float32) * 0.05
    w2 = jax.random.normal(keys[4], (dims[1], dims[2]), jnp.float32) * 0.05
    b2 = jax.random.normal(keys[5], (1, dims[2]), jnp.float32) * 0.05
    w3 = jax.random.normal(keys[6], (dims[2], 1), jnp.float32) * 0.05
    b3 = jax.random.normal(keys[7], (1, 1), jnp.float32) * 0.05
    return (we, be, w1, b1, w2, b2, w3, b3)


def reference(x, params):
    """Plain-JAX mirror of the PyTorch forward (project each token, then pool)."""
    we, be, w1, b1, w2, b2, w3, b3 = params
    enc = x @ we + be
    pooled = enc.mean(axis=1)
    h = jnp.maximum(pooled @ w1 + b1, 0.0)
    h = jnp.maximum(h @ w2 + b2, 0.0)
    return (h @ w3 + b3)[:, 0]


if __name__ == "__main__":
    B, S, Din = 4, 8, 32          # batch, sequence, input feature dim
    ENC_H = 32                    # encoder output dim (== classifier input_dim)
    EMBEDDINGS = (32, 16)         # hidden units of the classifier MLP

    key = jax.random.PRNGKey(0)
    kx, kp = jax.random.split(key)
    x = jax.random.normal(kx, (B, S, Din), jnp.float32)
    params = make_params(kp, Din, ENC_H, EMBEDDINGS)

    out = jax.block_until_ready(binary_classifier(x, params))
    ref = reference(x, params)

    assert out.shape == (B,), out.shape
    # Kernel pools before the (linear) encoder, fuses We@W1 and pads hidden dims --
    # all exact in real arithmetic; tolerance covers f32 matmul reordering only.
    assert jnp.allclose(out, ref, atol=1e-3, rtol=1e-3), (out, ref)
    print("KERNEL_OK")
</pallas_src>

<mosaic_0001>
module attributes {stable_mosaic.version = 11 : i64} {
  func.func @binary_classifier_kernel(%arg0: i32, %arg1: i32, %arg2: memref<4x8x32xf32, #tpu.memory_space<vmem>>, %arg3: memref<32x128xf32, #tpu.memory_space<vmem>>, %arg4: memref<1x128xf32, #tpu.memory_space<vmem>>, %arg5: memref<128x128xf32, #tpu.memory_space<vmem>>, %arg6: memref<1x128xf32, #tpu.memory_space<vmem>>, %arg7: memref<1x128xf32, #tpu.memory_space<vmem>>, %arg8: memref<1x1xf32, #tpu.memory_space<vmem>>, %arg9: memref<1x4xf32, #tpu.memory_space<vmem>>, %arg10: memref<4x32xf32, #tpu.memory_space<vmem>>) attributes {dimension_semantics = [#tpu.dimension_semantics<parallel>, #tpu.dimension_semantics<arbitrary>], iteration_bounds = array<i64: 1, 1>, scalar_prefetch = 0 : i64, scratch_operands = 1 : i64, tpu.core_type = #tpu.core_type<tc>, window_params = [{transform_indices = @transform_0, window_bounds = array<i64: 4, 8, 32>}, {pipeline_mode = #tpu.pipeline_mode<synchronous>, transform_indices = @transform_1, window_bounds = array<i64: 32, 128>}, {pipeline_mode = #tpu.pipeline_mode<synchronous>, transform_indices = @transform_2, window_bounds = array<i64: 1, 128>}, {pipeline_mode = #tpu.pipeline_mode<synchronous>, transform_indices = @transform_3, window_bounds = array<i64: 128, 128>}, {pipeline_mode = #tpu.pipeline_mode<synchronous>, transform_indices = @transform_4, window_bounds = array<i64: 1, 128>}, {pipeline_mode = #tpu.pipeline_mode<synchronous>, transform_indices = @transform_5, window_bounds = array<i64: 1, 128>}, {pipeline_mode = #tpu.pipeline_mode<synchronous>, transform_indices = @transform_6, window_bounds = array<i64: 1, 1>}, {transform_indices = @transform_7, window_bounds = array<i64: 1, 4>}]} {
    %c0_i32 = arith.constant 0 : i32
    %0 = arith.cmpi eq, %arg1, %c0_i32 : i32
    %1 = arith.extui %0 : i1 to i32
    %c0_i32_0 = arith.constant 0 : i32
    %2 = arith.cmpi ne, %1, %c0_i32_0 : i32
    scf.if %2 {
      %cst_9 = arith.constant 0.000000e+00 : f32
      %11 = vector.broadcast %cst_9 : f32 to vector<4x32xf32>
      %c0_10 = arith.constant 0 : index
      %c0_11 = arith.constant 0 : index
      %12 = vector.load %arg10[%c0_10, %c0_11] : memref<4x32xf32, #tpu.memory_space<vmem>>, vector<4x32xf32>
      tpu.vector_store %arg10[%c0_10, %c0_11], %11 {strides = array<i32>} : memref<4x32xf32, #tpu.memory_space<vmem>>, vector<4x32xf32>,
    } else {
    }
    %c0 = arith.constant 0 : index
    %c0_1 = arith.constant 0 : index
    %3 = vector.load %arg10[%c0, %c0_1] : memref<4x32xf32, #tpu.memory_space<vmem>>, vector<4x32xf32>
    %c0_2 = arith.constant 0 : index
    %c0_3 = arith.constant 0 : index
    %c0_4 = arith.constant 0 : index
    %4 = vector.load %arg2[%c0_2, %c0_3, %c0_4] : memref<4x8x32xf32, #tpu.memory_space<vmem>>, vector<4x8x32xf32>
    %cst = arith.constant dense<0.000000e+00> : vector<4x32xf32>
    %5 = vector.multi_reduction <add>, %4, %cst [1] : vector<4x8x32xf32> to vector<4x32xf32>
    %6 = arith.addf %3, %5 : vector<4x32xf32>
    %c0_5 = arith.constant 0 : index
    %c0_6 = arith.constant 0 : index
    %7 = vector.load %arg10[%c0_5, %c0_6] : memref<4x32xf32, #tpu.memory_space<vmem>>, vector<4x32xf32>
    tpu.vector_store %arg10[%c0_5, %c0_6], %6 {strides = array<i32>} : memref<4x32xf32, #tpu.memory_space<vmem>>, vector<4x32xf32>,
    %c0_i32_7 = arith.constant 0 : i32
    %8 = arith.cmpi eq, %arg1, %c0_i32_7 : i32
    %9 = arith.extui %8 : i1 to i32
    %c0_i32_8 = arith.constant 0 : i32
    %10 = arith.cmpi ne, %9, %c0_i32_8 : i32
    scf.if %10 {
      %c0_9 = arith.constant 0 : index
      %c0_10 = arith.constant 0 : index
      %11 = vector.load %arg10[%c0_9, %c0_10] : memref<4x32xf32, #tpu.memory_space<vmem>>, vector<4x32xf32>
      %c0_11 = arith.constant 0 : index
      %c0_12 = arith.constant 0 : index
      %12 = vector.load %arg3[%c0_11, %c0_12] : memref<32x128xf32, #tpu.memory_space<vmem>>, vector<32x128xf32>
      %cst_13 = arith.constant dense<0.000000e+00> : vector<4x128xf32>
      %13 = tpu.matmul %11, %12, %cst_13 {dimension_numbers = #tpu.dot_dimension_numbers<[1], [0], [0], [1], [0, 0, 1, 1], [], []>} : vector<4x32xf32>, vector<32x128xf32>, vector<4x128xf32> -> vector<4x128xf32>
      %c0_14 = arith.constant 0 : index
      %c0_15 = arith.constant 0 : index
      %14 = vector.load %arg4[%c0_14, %c0_15] : memref<1x128xf32, #tpu.memory_space<vmem>>, vector<1x128xf32>
      %15 = vector.broadcast %14 : vector<1x128xf32> to vector<4x128xf32>
      %16 = arith.addf %13, %15 : vector<4x128xf32>
      %cst_16 = arith.constant 0.000000e+00 : f32
      %17 = vector.broadcast %cst_16 : f32 to vector<4x128xf32>
      %18 = arith.maximumf %16, %17 : vector<4x128xf32>
      %c0_17 = arith.constant 0 : index
      %c0_18 = arith.constant 0 : index
      %19 = vector.load %arg5[%c0_17, %c0_18] : memref<128x128xf32, #tpu.memory_space<vmem>>, vector<128x128xf32>
      %cst_19 = arith.constant dense<0.000000e+00> : vector<4x128xf32>
      %20 = tpu.matmul %18, %19, %cst_19 {dimension_numbers = #tpu.dot_dimension_numbers<[1], [0], [0], [1], [0, 0, 1, 1], [], []>} : vector<4x128xf32>, vector<128x128xf32>, vector<4x128xf32> -> vector<4x128xf32>
      %c0_20 = arith.constant 0 : index
      %c0_21 = arith.constant 0 : index
      %21 = vector.load %arg6[%c0_20, %c0_21] : memref<1x128xf32, #tpu.memory_space<vmem>>, vector<1x128xf32>
      %22 = vector.broadcast %21 : vector<1x128xf32> to vector<4x128xf32>
      %23 = arith.addf %20, %22 : vector<4x128xf32>
      %cst_22 = arith.constant 0.000000e+00 : f32
      %24 = vector.broadcast %cst_22 : f32 to vector<4x128xf32>
      %25 = arith.maximumf %23, %24 : vector<4x128xf32>
      %c0_23 = arith.constant 0 : index
      %c0_24 = arith.constant 0 : index
      %26 = vector.load %arg7[%c0_23, %c0_24] : memref<1x128xf32, #tpu.memory_space<vmem>>, vector<1x128xf32>
      %27 = vector.broadcast %26 : vector<1x128xf32> to vector<4x128xf32>
      %28 = arith.mulf %25, %27 : vector<4x128xf32>
      %cst_25 = arith.constant dense<0.000000e+00> : vector<4xf32>
      %29 = vector.multi_reduction <add>, %28, %cst_25 [1] : vector<4x128xf32> to vector<4xf32>
      %30 = vector.shape_cast %29 : vector<4xf32> to vector<4x1xf32>
      %31 = tpu.transpose %30, [1, 0] : vector<4x1xf32> -> vector<1x4xf32>
      %c0_26 = arith.constant 0 : index
      %c0_27 = arith.constant 0 : index
      %32 = vector.load %arg8[%c0_26, %c0_27] : memref<1x1xf32, #tpu.memory_space<vmem>>, vector<1x1xf32>
      %33 = vector.broadcast %32 : vector<1x1xf32> to vector<1x4xf32>
      %34 = arith.addf %31, %33 : vector<1x4xf32>
      %c0_28 = arith.constant 0 : index
      %c0_29 = arith.constant 0 : index
      %35 = vector.load %arg9[%c0_28, %c0_29] : memref<1x4xf32, #tpu.memory_space<vmem>>, vector<1x4xf32>
      tpu.vector_store %arg9[%c0_28, %c0_29], %34 {strides = array<i32>} : memref<1x4xf32, #tpu.memory_space<vmem>>, vector<1x4xf32>,
    } else {
    }
    return
  }
  func.func @transform_0(%arg0: i32, %arg1: i32) -> (i32, i32, i32) {
    %c0_i32 = arith.constant 0 : i32
    %c0_i32_0 = arith.constant 0 : i32
    return %arg0, %arg1, %c0_i32 : i32, i32, i32
  }
  func.func @transform_1(%arg0: i32, %arg1: i32) -> (i32, i32) {
    %c0_i32 = arith.constant 0 : i32
    %c0_i32_0 = arith.constant 0 : i32
    %c0_i32_1 = arith.constant 0 : i32
    return %c0_i32, %c0_i32_0 : i32, i32
  }
  func.func @transform_2(%arg0: i32, %arg1: i32) -> (i32, i32) {
    %c0_i32 = arith.constant 0 : i32
    %c0_i32_0 = arith.constant 0 : i32
    %c0_i32_1 = arith.constant 0 : i32
    return %c0_i32, %c0_i32_0 : i32, i32
  }
  func.func @transform_3(%arg0: i32, %arg1: i32) -> (i32, i32) {
    %c0_i32 = arith.constant 0 : i32
    %c0_i32_0 = arith.constant 0 : i32
    %c0_i32_1 = arith.constant 0 : i32
    return %c0_i32, %c0_i32_0 : i32, i32
  }
  func.func @transform_4(%arg0: i32, %arg1: i32) -> (i32, i32) {
    %c0_i32 = arith.constant 0 : i32
    %c0_i32_0 = arith.constant 0 : i32
    %c0_i32_1 = arith.constant 0 : i32
    return %c0_i32, %c0_i32_0 : i32, i32
  }
  func.func @transform_5(%arg0: i32, %arg1: i32) -> (i32, i32) {
    %c0_i32 = arith.constant 0 : i32
    %c0_i32_0 = arith.constant 0 : i32
    %c0_i32_1 = arith.constant 0 : i32
    return %c0_i32, %c0_i32_0 : i32, i32
  }
  func.func @transform_6(%arg0: i32, %arg1: i32) -> (i32, i32) {
    %c0_i32 = arith.constant 0 : i32
    %c0_i32_0 = arith.constant 0 : i32
    %c0_i32_1 = arith.constant 0 : i32
    return %c0_i32, %c0_i32_0 : i32, i32
  }
  func.func @transform_7(%arg0: i32, %arg1: i32) -> (i32, i32) {
    %c0_i32 = arith.constant 0 : i32
    %c0_i32_0 = arith.constant 0 : i32
    return %c0_i32, %arg0 : i32, i32
  }
}

</mosaic_0001>

<llo_original>
// kernel: tpu_custom_call.1
$region0: #{tpu_custom_call.1}
  #allocation0 [shape = 'u32[]', space=smem, size = 0x4, offset = 0x4, fixed_abs, tag = 'smem constant byte address 0x4 - core index']
  #allocation1 [shape = 'u32[144,128]{1,0:T(1,128)}', space=vmem, size = 0x12000, scoped, tag = 'internal scratch']
  #allocation2 [shape = 'f32[4,32]{1,0:T(4,128)}', space=vmem, size = 0x800, scoped, tag = 'scratch operand']
  #allocation3 [shape = 'f32[1,1]{1,0:T(1,128)S(1)}', space=vmem, size = 0x200, scoped, tag = 'scoped memory for tpu_custom_call.1']
  %s0 = inlined_call_operand.hbm [shape: f32[4,8,32], index: 0, kind: input, shape index: {}]
  %s1 = inlined_call_operand.hbm [shape: f32[32,128], index: 1, kind: input, shape index: {}]
  %s2 = inlined_call_operand.vmem [shape: f32[1,128], index: 2, kind: input, shape index: {}]
  %s3 = inlined_call_operand.hbm [shape: f32[128,128], index: 3, kind: input, shape index: {}]
  %s4 = inlined_call_operand.vmem [shape: f32[1,128], index: 4, kind: input, shape index: {}]
  %s5 = inlined_call_operand.vmem [shape: f32[1,128], index: 5, kind: input, shape index: {}]
  %s6 = inlined_call_operand.<no memory space> [shape: f32[1,1], index: 6, kind: input, shape index: {}]
  %s7 = inlined_call_operand.hbm [shape: f32[1,4], index: 7, kind: output, shape index: {}]
  %s8 = sld [smem:[#allocation0]]
  $region58: #{tpu_custom_call.1} parent=0
    _
  %s10 = ssub.s32 1, %s8
  %s11 = scalar_select 0, %s10, %s8
  %v12 = vstv %s6
  %13 = vst [vmem:[#allocation3] sm:$0x1] %v12
  $region1: #{tpu_custom_call.1} parent=0
    #allocation4 [shape = 'u8[16384]{0}', space=vmem, size = 0x4000, scoped, tag = 'input window, operand 0, single buffered']
    #allocation5 [shape = 's32[1]{0}', space=sflag, size = 0x4, scoped, tag = 'scoped memory for tpu_custom_call.1']
    #allocation6 [shape = 's32[1]{0}', space=sflag, size = 0x4, scoped, tag = 'scoped memory for tpu_custom_call.1']
    #allocation7 [shape = 'u8[16384]{0}', space=vmem, size = 0x4000, scoped, tag = 'input window, operand 1, single buffered']
    #allocation8 [shape = 's32[1]{0}', space=sflag, size = 0x4, scoped, tag = 'scoped memory for tpu_custom_call.1']
    #allocation9 [shape = 'u8[65536]{0}', space=vmem, size = 0x10000, scoped, tag = 'input window, operand 3, single buffered']
    #allocation10 [shape = 'u8[512]{0}', space=vmem, size = 0x400, scoped, tag = 'output window, operand 0, single buffered']
    %14 = vsyncpa [#allocation5], 0
    %15 = vsyncpa [#allocation8], 0
    %16 = vsyncpa [#allocation6], 0
    // Predicated region
    $region2: #{tpu_custom_call.1} parent=1 // pred_check
      _
    $region3: #{tpu_custom_call.1} parent=1 // pred_check_branch
      %18 = sbr.rel (0) target = $region5
    $region4: #{tpu_custom_call.1} parent=1 // pred_region
      %s20 = ssub.s32 512, 512
      %21 = vsyncadd [#allocation5], %s20
      %s22 = sshll.u32 [#allocation4], 4
      %s23 = int_to_ptr.vmem [resolvable:$true] %s22
      %28 = dma.hbm_to_vmem [thread:$0]  %s0, 512, %s23, [#allocation5], 128, 128, 8
    $region5: #{tpu_custom_call.1} parent=1 // pred_fallthru
      _
    // Predicated region
    $region6: #{tpu_custom_call.1} parent=1 // pred_check
      _
    $region7: #{tpu_custom_call.1} parent=1 // pred_check_branch
      %30 = sbr.rel (0) target = $region9
    $region8: #{tpu_custom_call.1} parent=1 // pred_region
      %s32 = ssub.s32 512, 512
      %33 = vsyncadd [#allocation8], %s32
      %s34 = sshll.u32 [#allocation7], 4
      %s35 = int_to_ptr.vmem [resolvable:$true] %s34
      %40 = dma.hbm_to_vmem [thread:$0]  %s1, 512, %s35, [#allocation8], 128, 128, 8
    $region9: #{tpu_custom_call.1} parent=1 // pred_fallthru
      _
    // Predicated region
    $region10: #{tpu_custom_call.1} parent=1 // pred_check
      _
    $region11: #{tpu_custom_call.1} parent=1 // pred_check_branch
      %42 = sbr.rel (0) target = $region13
    $region12: #{tpu_custom_call.1} parent=1 // pred_region
      _
    $region13: #{tpu_custom_call.1} parent=1 // pred_fallthru
      _
    // Predicated region
    $region14: #{tpu_custom_call.1} parent=1 // pred_check
      _
    $region15: #{tpu_custom_call.1} parent=1 // pred_check_branch
      %44 = sbr.rel (0) target = $region17
    $region16: #{tpu_custom_call.1} parent=1 // pred_region
      %s46 = ssub.s32 2048, 2048
      %47 = vsyncadd [#allocation8], %s46
      %s48 = sshll.u32 [#allocation9], 4
      %s49 = int_to_ptr.vmem [resolvable:$true] %s48
      %54 = dma.hbm_to_vmem [thread:$0]  %s3, 2048, %s49, [#allocation8], 128, 128, 8
    $region17: #{tpu_custom_call.1} parent=1 // pred_fallthru
      _
    // Predicated region
    $region18: #{tpu_custom_call.1} parent=1 // pred_check
      _
    $region19: #{tpu_custom_call.1} parent=1 // pred_check_branch
      %56 = sbr.rel (0) target = $region21
    $region20: #{tpu_custom_call.1} parent=1 // pred_region
      _
    $region21: #{tpu_custom_call.1} parent=1 // pred_fallthru
      _
    // Predicated region
    $region22: #{tpu_custom_call.1} parent=1 // pred_check
      _
    $region23: #{tpu_custom_call.1} parent=1 // pred_check_branch
      %58 = sbr.rel (0) target = $region25
    $region24: #{tpu_custom_call.1} parent=1 // pred_region
      _
    $region25: #{tpu_custom_call.1} parent=1 // pred_fallthru
      _
    // Predicated region
    $region26: #{tpu_custom_call.1} parent=1 // pred_check
      _
    $region27: #{tpu_custom_call.1} parent=1 // pred_check_branch
      %60 = sbr.rel (0) target = $region29
    $region28: #{tpu_custom_call.1} parent=1 // pred_region
      _
    $region29: #{tpu_custom_call.1} parent=1 // pred_fallthru
      _
    // Predicated region
    $region30: #{tpu_custom_call.1} parent=1 // pred_check
      _
    $region31: #{tpu_custom_call.1} parent=1 // pred_check_branch
      %62 = sbr.rel (0) target = $region33
    $region32: #{tpu_custom_call.1} parent=1 // pred_region
      %63 = dma.done [#allocation5], 512
    $region33: #{tpu_custom_call.1} parent=1 // pred_fallthru
      _
    // Predicated region
    $region34: #{tpu_custom_call.1} parent=1 // pred_check
      _
    $region35: #{tpu_custom_call.1} parent=1 // pred_check_branch
      %65 = sbr.rel (0) target = $region37
    $region36: #{tpu_custom_call.1} parent=1 // pred_region
      %66 = dma.done [#allocation8], 512
    $region37: #{tpu_custom_call.1} parent=1 // pred_fallthru
      _
    // Predicated region
    $region38: #{tpu_custom_call.1} parent=1 // pred_check
      _
    $region39: #{tpu_custom_call.1} parent=1 // pred_check_branch
      %68 = sbr.rel (0) target = $region41
    $region40: #{tpu_custom_call.1} parent=1 // pred_region
      %69 = dma.done [#allocation8], 2048
    $region41: #{tpu_custom_call.1} parent=1 // pred_fallthru
      _
    %p70 = scmp.eq.s32.totalorder 0, 0
    // Predicated region
    $region42: #{tpu_custom_call.1} parent=1 // pred_check
      %p71 = pneg %p70
    $region43: #{tpu_custom_call.1} parent=1 // pred_check_branch
      %73 = sbr.rel (%p71) target = $region45
    $region44: #{tpu_custom_call.1} parent=1 // pred_region
      %vm74 = vcmask 257024
      %75 = vst.msk [vmem:[#allocation2] sm:$0xf] %vm74, 0.0
    $region45: #{tpu_custom_call.1} parent=1 // pred_fallthru
      _
    %v76 = vld [vmem:[#allocation2] sm:$0xf]
    %v77 = vld [vmem:[#allocation4] sm:$0xff]
    %v78 = vld [vmem:[#allocation4 + $0x8] sm:$0xff]
    %v79 = vld [vmem:[#allocation4 + $0x10] sm:$0xff]
    %v80 = vld [vmem:[#allocation4 + $0x18] sm:$0xff]
    %vm81 = vcmask 261120
    %v82 = vsel %vm81, %v77, 0.0
    %v83 = vrot.slane %v82, 4
    %v84 = vadd.f32 %v82, %v83
    %v85 = vrot.slane %v84, 2
    %v86 = vadd.f32 %v84, %v85
    %v87 = vrot.slane %v86, 1
    %v88 = vadd.f32 %v86, %v87
    %v89 = vsel %vm81, %v78, 0.0
    %v90 = vrot.slane %v89, 4
    %v91 = vadd.f32 %v89, %v90
    %v92 = vrot.slane %v91, 2
    %v93 = vadd.f32 %v91, %v92
    %v94 = vrot.slane %v93, 1
    %v95 = vadd.f32 %v93, %v94
    %v96 = vsel %vm81, %v79, 0.0
    %v97 = vrot.slane %v96, 4
    %v98 = vadd.f32 %v96, %v97
    %v99 = vrot.slane %v98, 2
    %v100 = vadd.f32 %v98, %v99
    %v101 = vrot.slane %v100, 1
    %v102 = vadd.f32 %v100, %v101
    %v103 = vsel %vm81, %v80, 0.0
    %v104 = vrot.slane %v103, 4
    %v105 = vadd.f32 %v103, %v104
    %v106 = vrot.slane %v105, 2
    %v107 = vadd.f32 %v105, %v106
    %v108 = vrot.slane %v107, 1
    %v109 = vadd.f32 %v107, %v108
    %vm114 = vcmask 1041409
    %v115 = vsel %vm114, %v95, %v88
    %vm116 = vcmask 1042434
    %v117 = vsel %vm116, %v102, %v115
    %vm118 = vcmask 1043459
    %v119 = vsel %vm118, %v109, %v117
    %v121 = vadd.f32 %v76, %v119
    %vm122 = vcmask 257024
    %123 = vst.msk [vmem:[#allocation2] sm:$0xf] %vm122, %v121
    // Predicated region
    $region46: #{tpu_custom_call.1} parent=1 // pred_check
      %p124 = pneg %p70
    $region47: #{tpu_custom_call.1} parent=1 // pred_check_branch
      %126 = sbr.rel (%p124) target = $region49
    $region48: #{tpu_custom_call.1} parent=1 // pred_region
      %v127 = vld [vmem:[#allocation2] sm:$0xf]
      %v128 = vld [vmem:[#allocation7] sm:$0xff]
      %v129 = vld [vmem:[#allocation7 + $0x8] sm:$0xff]
      %v130 = vld [vmem:[#allocation7 + $0x10] sm:$0xff]
      %v131 = vld [vmem:[#allocation7 + $0x18] sm:$0xff]
      %v132 = vld [vmem:[%s2] sm:$0x1]
      %v134 = vlaneseq
      %v135 = vshrl.u32 %v134, 7
      %v136 = vsub.s32 0, %v135
      %v137 = vrot.slane %v132, %v136
      %v140 = vsel %vm81, %v127, 0
      %142 = vmatprep.subr.mxu0 0.0
      %143 = vmatpush1.msra.mxu0 %v128
      %144 = vmatprep.subr.mxu0 0.0
      %145 = vmatpush1.msra.mxu0 %v129
      %146 = vmatprep.subr.mxu0 0.0
      %147 = vmatpush1.msra.mxu0 %v130
      %148 = vmatprep.subr.mxu0 0.0
      %149 = vmatpush1.msra.mxu0 %v131
      %150 = vmatprep.subr.mxu0 0.0
      %151 = vmatpush1.msra.mxu0 0.0
      %152 = vmatprep.subr.mxu0 0.0
      %153 = vmatpush1.msra.mxu0 0.0
      %154 = vmatprep.subr.mxu0 0.0
      %155 = vmatpush1.msra.mxu0 0.0
      %156 = vmatprep.subr.mxu0 0.0
      %157 = vmatpush1.msra.mxu0 0.0
      %158 = vmatprep.subr.mxu0 0.0
      %159 = vmatpush1.msra.mxu0 0.0
      %160 = vmatprep.subr.mxu0 0.0
      %161 = vmatpush1.msra.mxu0 0.0
      %162 = vmatprep.subr.mxu0 0.0
      %163 = vmatpush1.msra.mxu0 0.0
      %164 = vmatprep.subr.mxu0 0.0
      %165 = vmatpush1.msra.mxu0 0.0
      %166 = vmatprep.subr.mxu0 0.0
      %167 = vmatpush1.msra.mxu0 0.0
      %168 = vmatprep.subr.mxu0 0.0
      %169 = vmatpush1.msra.mxu0 0.0
      %170 = vmatprep.subr.mxu0 0.0
      %171 = vmatpush1.msra.mxu0 0.0
      %172 = vmatprep.subr.mxu0 0.0
      %173 = vmatpush1.msra.mxu0 0.0
      %174 = vmatprep.subr.mxu0 0.0
      %175 = vmatpush1.msra.mxu0 0.0
      %176 = vmatprep.subr.mxu0 0.0
      %177 = vmatpush1.msra.mxu0 0.0
      %178 = vmatprep.subr.mxu0 0.0
      %179 = vmatpush1.msra.mxu0 0.0
      %180 = vmatprep.subr.mxu0 0.0
      %181 = vmatpush1.msra.mxu0 0.0
      %182 = vmatprep.subr.mxu0 0.0
      %183 = vmatpush1.msra.mxu0 0.0
      %184 = vmatprep.subr.mxu0 0.0
      %185 = vmatpush1.msra.mxu0 0.0
      %186 = vmatprep.subr.mxu0 0.0
      %187 = vmatpush1.msra.mxu0 0.0
      %188 = vmatprep.subr.mxu0 0.0
      %189 = vmatpush1.msra.mxu0 0.0
      %190 = vmatprep.subr.mxu0 0.0
      %191 = vmatpush1.msra.mxu0 0.0
      %192 = vmatprep.subr.mxu0 0.0
      %193 = vmatpush1.msra.mxu0 0.0
      %194 = vmatprep.subr.mxu0 0.0
      %195 = vmatpush1.msra.mxu0 0.0
      %196 = vmatprep.subr.mxu0 0.0
      %197 = vmatpush1.msra.mxu0 0.0
      %198 = vmatprep.subr.mxu0 0.0
      %199 = vmatpush1.msra.mxu0 0.0
      %200 = vmatprep.subr.mxu0 0.0
      %201 = vmatpush1.msra.mxu0 0.0
      %202 = vmatprep.subr.mxu0 0.0
      %203 = vmatpush1.msra.mxu0 0.0
      %204 = vmatprep.subr.mxu0 0.0
      %205 = vmatpush1.msra.mxu0 0.0
      %206 = vmatprep.mubr.f32.mxu0 0.0
      %207 = vmatmul.mubr.f32.gmra.mrb[0].mxu0 %v140
      %v208 = vpop.f32.mrb[0].mxu0
      %v209 = vadd.f32 %v137, %v208
      %v210 = vpop.f32.mrb[0].mxu0
      %211 = vdwg.mxu0
      %v212 = vmax.f32 %v209, 0.0
      %v213 = vld [vmem:[#allocation9] sm:$0xff]
      %v214 = vld [vmem:[#allocation9 + $0x8] sm:$0xff]
      %v215 = vld [vmem:[#allocation9 + $0x10] sm:$0xff]
      %v216 = vld [vmem:[#allocation9 + $0x18] sm:$0xff]
      %v217 = vld [vmem:[#allocation9 + $0x20] sm:$0xff]
      %v218 = vld [vmem:[#allocation9 + $0x28] sm:$0xff]
      %v219 = vld [vmem:[#allocation9 + $0x30] sm:$0xff]
      %v220 = vld [vmem:[#allocation9 + $0x38] sm:$0xff]
      %v221 = vld [vmem:[#allocation9 + $0x40] sm:$0xff]
      %v222 = vld [vmem:[#allocation9 + $0x48] sm:$0xff]
      %v223 = vld [vmem:[#allocation9 + $0x50] sm:$0xff]
      %v224 = vld [vmem:[#allocation9 + $0x58] sm:$0xff]
      %v225 = vld [vmem:[#allocation9 + $0x60] sm:$0xff]
      %v226 = vld [vmem:[#allocation9 + $0x68] sm:$0xff]
      %v227 = vld [vmem:[#allocation9 + $0x70] sm:$0xff]
      %v228 = vld [vmem:[#allocation9 + $0x78] sm:$0xff]
      %v229 = vld [vmem:[%s4] sm:$0x1]
      %v231 = vlaneseq
      %v232 = vshrl.u32 %v231, 7
      %v233 = vsub.s32 0, %v232
      %v234 = vrot.slane %v229, %v233
      %236 = vmatprep.subr.mxu0 0.0
      %237 = vmatpush1.msra.mxu0 %v213
      %238 = vmatprep.subr.mxu0 0.0
      %239 = vmatpush1.msra.mxu0 %v214
      %240 = vmatprep.subr.mxu0 0.0
      %241 = vmatpush1.msra.mxu0 %v215
      %242 = vmatprep.subr.mxu0 0.0
      %243 = vmatpush1.msra.mxu0 %v216
      %244 = vmatprep.subr.mxu0 0.0
      %245 = vmatpush1.msra.mxu0 %v217
      %246 = vmatprep.subr.mxu0 0.0
      %247 = vmatpush1.msra.mxu0 %v218
      %248 = vmatprep.subr.mxu0 0.0
      %249 = vmatpush1.msra.mxu0 %v219
      %250 = vmatprep.subr.mxu0 0.0
      %251 = vmatpush1.msra.mxu0 %v220
      %252 = vmatprep.subr.mxu0 0.0
      %253 = vmatpush1.msra.mxu0 %v221
      %254 = vmatprep.subr.mxu0 0.0
      %255 = vmatpush1.msra.mxu0 %v222
      %256 = vmatprep.subr.mxu0 0.0
      %257 = vmatpush1.msra.mxu0 %v223
      %258 = vmatprep.subr.mxu0 0.0
      %259 = vmatpush1.msra.mxu0 %v224
      %260 = vmatprep.subr.mxu0 0.0
      %261 = vmatpush1.msra.mxu0 %v225
      %262 = vmatprep.subr.mxu0 0.0
      %263 = vmatpush1.msra.mxu0 %v226
      %264 = vmatprep.subr.mxu0 0.0
      %265 = vmatpush1.msra.mxu0 %v227
      %266 = vmatprep.subr.mxu0 0.0
      %267 = vmatpush1.msra.mxu0 %v228
      %268 = vmatprep.subr.mxu0 0.0
      %269 = vmatpush1.msra.mxu0 0.0
      %270 = vmatprep.subr.mxu0 0.0
      %271 = vmatpush1.msra.mxu0 0.0
      %272 = vmatprep.subr.mxu0 0.0
      %273 = vmatpush1.msra.mxu0 0.0
      %274 = vmatprep.subr.mxu0 0.0
      %275 = vmatpush1.msra.mxu0 0.0
      %276 = vmatprep.subr.mxu0 0.0
      %277 = vmatpush1.msra.mxu0 0.0
      %278 = vmatprep.subr.mxu0 0.0
      %279 = vmatpush1.msra.mxu0 0.0
      %280 = vmatprep.subr.mxu0 0.0
      %281 = vmatpush1.msra.mxu0 0.0
      %282 = vmatprep.subr.mxu0 0.0
      %283 = vmatpush1.msra.mxu0 0.0
      %284 = vmatprep.subr.mxu0 0.0
      %285 = vmatpush1.msra.mxu0 0.0
      %286 = vmatprep.subr.mxu0 0.0
      %287 = vmatpush1.msra.mxu0 0.0
      %288 = vmatprep.subr.mxu0 0.0
      %289 = vmatpush1.msra.mxu0 0.0
      %290 = vmatprep.subr.mxu0 0.0
      %291 = vmatpush1.msra.mxu0 0.0
      %292 = vmatprep.subr.mxu0 0.0
      %293 = vmatpush1.msra.mxu0 0.0
      %294 = vmatprep.subr.mxu0 0.0
      %295 = vmatpush1.msra.mxu0 0.0
      %296 = vmatprep.subr.mxu0 0.0
      %297 = vmatpush1.msra.mxu0 0.0
      %298 = vmatprep.subr.mxu0 0.0
      %299 = vmatpush1.msra.mxu0 0.0
      %300 = vmatprep.mubr.f32.mxu0 0.0
      %301 = vmatmul.mubr.f32.gmra.mrb[0].mxu0 %v212
      %v302 = vpop.f32.mrb[0].mxu0
      %v303 = vadd.f32 %v234, %v302
      %v304 = vpop.f32.mrb[0].mxu0
      %305 = vdwg.mxu0
      %v306 = vmax.f32 %v303, 0.0
      %v307 = vld [vmem:[%s5] sm:$0x1]
      %v309 = vlaneseq
      %v310 = vshrl.u32 %v309, 7
      %v311 = vsub.s32 0, %v310
      %v312 = vrot.slane %v307, %v311
      %v314 = vmul.f32 %v306, %v312
      %vm315 = vcmask 1043456
      %v316 = vsel %vm315, %v314, 0.0
      %317 = vadd.xlane.f32.xlu0 %v316
      %v318 = vpop.xlane.xlu0 %317
      %319 = vxpose.xlu0.b32.start [1/16] %v318, 128
      %320 = vxpose.xlu0.b32.cont [2/16] 0.0, 128
      %321 = vxpose.xlu0.b32.cont [3/16] 0.0, 128
      %322 = vxpose.xlu0.b32.cont [4/16] 0.0, 128
      %323 = vxpose.xlu0.b32.cont [5/16] 0.0, 128
      %324 = vxpose.xlu0.b32.cont [6/16] 0.0, 128
      %325 = vxpose.xlu0.b32.cont [7/16] 0.0, 128
      %326 = vxpose.xlu0.b32.cont [8/16] 0.0, 128
      %327 = vxpose.xlu0.b32.cont [9/16] 0.0, 128
      %328 = vxpose.xlu0.b32.cont [10/16] 0.0, 128
      %329 = vxpose.xlu0.b32.cont [11/16] 0.0, 128
      %330 = vxpose.xlu0.b32.cont [12/16] 0.0, 128
      %331 = vxpose.xlu0.b32.cont [13/16] 0.0, 128
      %332 = vxpose.xlu0.b32.cont [14/16] 0.0, 128
      %333 = vxpose.xlu0.b32.cont [15/16] 0.0, 128
      %334 = vxpose.xlu0.b32.end [16/16] 0.0, 128
      %v335 = vpop.trf.xlu0
      %v336 = vpop.trf.xlu0
      %v337 = vpop.trf.xlu0
      %v338 = vpop.trf.xlu0
      %v339 = vpop.trf.xlu0
      %v340 = vpop.trf.xlu0
      %v341 = vpop.trf.xlu0
      %v342 = vpop.trf.xlu0
      %v343 = vpop.trf.xlu0
      %v344 = vpop.trf.xlu0
      %v345 = vpop.trf.xlu0
      %v346 = vpop.trf.xlu0
      %v347 = vpop.trf.xlu0
      %v348 = vpop.trf.xlu0
      %v349 = vpop.trf.xlu0
      %v350 = vpop.trf.xlu0
      %v351 = vld [vmem:[#allocation3] sm:$0x1]
      %353 = vset.pattern.permute.xlu0 0
      %354 = vperm.xlu0 %353, %v351
      %v355 = vpop.permute.xlu0 %354
      %v357 = vlaneseq
      %v358 = vshrl.u32 %v357, 7
      %v359 = vsub.s32 0, %v358
      %v360 = vrot.slane %v355, %v359
      %v361 = vadd.f32 %v335, %v360
      %vm362 = vcmask 24576
      %363 = vst.msk [vmem:[#allocation10] sm:$0x1] %vm362, %v361
    $region49: #{tpu_custom_call.1} parent=1 // pred_fallthru
      _
    // Predicated region
    $region50: #{tpu_custom_call.1} parent=1 // pred_check
      _
    $region51: #{tpu_custom_call.1} parent=1 // pred_check_branch
      %365 = sbr.rel (0) target = $region53
    $region52: #{tpu_custom_call.1} parent=1 // pred_region
      %s367 = ssub.s32 16, 16
      %368 = vsyncadd [#allocation6], %s367
      %s370 = sshll.u32 [#allocation10], 4
      %s371 = int_to_ptr.vmem [resolvable:$true] %s370
      %373 = dma.vmem_to_hbm [thread:$0]  %s371, 16, %s7, [#allocation6]
    $region53: #{tpu_custom_call.1} parent=1 // pred_fallthru
      _
    // Predicated region
    $region54: #{tpu_custom_call.1} parent=1 // pred_check
      _
    $region55: #{tpu_custom_call.1} parent=1 // pred_check_branch
      %375 = sbr.rel (0) target = $region57
    $region56: #{tpu_custom_call.1} parent=1 // pred_region
      %376 = dma.done [#allocation6], 16
    $region57: #{tpu_custom_call.1} parent=1 // pred_fallthru
      _
    %377 = vsyncpa [#allocation5], 1
    %378 = vsyncpa [#allocation8], 1
    %379 = vsyncpa [#allocation6], 1

</llo_original>
